<compile_context>
chip_gen: v5e
topology: v5e:2x2
jax: 0.10.0
libtpu: 0.0.40
codegen_flags: <defaults>
</compile_context>

<pallas_src>
import functools

import jax
import jax.numpy as jnp
from jax.experimental import pallas as pl
from jax.experimental.pallas import tpu as pltpu


def _mlp_kernel(x_ref, w1_ref, b1_ref, w2_ref, b2_ref, out_ref):
    # x_ref : (tile_b, num_states)  input dtype (natural PyTorch layout)
    # w1_ref: (hidden, num_states)  compute dtype    b1_ref: (hidden, 1) f32
    # w2_ref: (num_actions, hidden) compute dtype    b2_ref: (num_actions, 1) f32
    # out_ref: (num_actions, tile_b) out dtype -- lane-dense store
    x = x_ref[...].astype(w1_ref.dtype)             # in-kernel cast (VPU)
    # h^T = W1 @ x^T : contract feature dims of both operands (no wrapper transpose)
    h = jax.lax.dot_general(
        w1_ref[...], x,
        dimension_numbers=(((1,), (1,)), ((), ())),
        preferred_element_type=jnp.float32)          # (hidden, tile_b) f32
    h = jnp.maximum(h + b1_ref[...], 0.0)            # f32 bias + ReLU (v5e-safe)
    out = jnp.dot(w2_ref[...], h.astype(w2_ref.dtype),
                  preferred_element_type=jnp.float32)  # (num_actions, tile_b)
    out_ref[...] = (out + b2_ref[...]).astype(out_ref.dtype)


def prepare_params(w1, b1, w2, b2, compute_dtype=jnp.bfloat16):
    """One-time parameter prep (hoisted out of the per-call path).
    PyTorch nn.Linear layout in, kernel-ready layout out:
      w1: (hidden, num_states)  -> compute_dtype
      b1: (hidden,)             -> (hidden, 1) f32
      w2: (num_actions, hidden) -> compute_dtype
      b2: (num_actions,)        -> (num_actions, 1) f32
    """
    hidden = w1.shape[0]
    num_actions = w2.shape[0]
    return (jnp.asarray(w1, compute_dtype),
            jnp.asarray(b1, jnp.float32).reshape(hidden, 1),
            jnp.asarray(w2, compute_dtype),
            jnp.asarray(b2, jnp.float32).reshape(num_actions, 1))


@functools.lru_cache(maxsize=1)
def _tensorcores_per_chip():
    # v7x has 2 TensorCores per chip; v5e/v6e have 1. Best-effort detection.
    try:
        kind = jax.devices()[0].device_kind.lower()
    except Exception:
        return 1
    return 2 if ("v7" in kind or "7x" in kind) else 1


def _pick_tile_b(batch, tile_b):
    lanes = 128
    max_tile = pl.cdiv(batch, lanes) * lanes          # no point tiling past the batch
    tile_b = max(lanes, min(pl.cdiv(tile_b, lanes) * lanes, max_tile))
    if _tensorcores_per_chip() >= 2 and max_tile >= 2 * lanes:
        # Ensure >= 2 grid steps so the "parallel" batch axis feeds both cores.
        half = pl.cdiv(pl.cdiv(batch, 2), lanes) * lanes
        tile_b = min(tile_b, max(lanes, half))
    return tile_b


@functools.partial(jax.jit, static_argnames=("tile_b", "batch_major_out"))
def rl_model_forward(x, params, *, tile_b=16384, batch_major_out=True):
    """Forward pass of RLModel: fc2(relu(fc1(x))).

    x      : (B, num_states), float; kept in its natural layout (no extra HBM pass).
    params : output of prepare_params().
    Returns (B, num_actions) in x.dtype; with batch_major_out=False returns the
    lane-dense (num_actions, B) result and skips the final layout pass.
    """
    w1, b1, w2, b2 = params
    B, num_states = x.shape
    hidden = w1.shape[0]
    num_actions = w2.shape[0]
    out_dtype = x.dtype

    tb = _pick_tile_b(B, tile_b)
    grid_b = pl.cdiv(B, tb)        # ragged last block handled by Pallas

    flops = 2 * B * (num_states * hidden + hidden * num_actions)
    bytes_accessed = int(
        B * num_states * x.dtype.itemsize
        + (w1.size + w2.size) * w1.dtype.itemsize
        + (b1.size + b2.size) * 4
        + B * num_actions * jnp.dtype(out_dtype).itemsize)

    out_t = pl.pallas_call(
        _mlp_kernel,
        out_shape=jax.ShapeDtypeStruct((num_actions, B), out_dtype),
        grid_spec=pltpu.PrefetchScalarGridSpec(
            num_scalar_prefetch=0,
            grid=(grid_b,),
            in_specs=[
                # batch-tiled activations in natural (B, num_states) layout
                pl.BlockSpec((tb, num_states), lambda i: (i, 0)),
                # weights/biases: same block every step -> VMEM-resident
                pl.BlockSpec((hidden, num_states), lambda i: (0, 0)),
                pl.BlockSpec((hidden, 1), lambda i: (0, 0)),
                pl.BlockSpec((num_actions, hidden), lambda i: (0, 0)),
                pl.BlockSpec((num_actions, 1), lambda i: (0, 0)),
            ],
            out_specs=pl.BlockSpec((num_actions, tb), lambda i: (0, i)),
        ),
        compiler_params=pltpu.CompilerParams(
            dimension_semantics=("parallel",),
            # x's 8-wide minor dim is lane-padded to 128 in VMEM; give headroom
            # so tile_b up to ~32K still fits (safe on v5e/v6e/v7x).
            vmem_limit_bytes=48 * 1024 * 1024),
        cost_estimate=pl.CostEstimate(flops=flops, transcendentals=0,
                                      bytes_accessed=bytes_accessed),
    )(x, w1, b1, w2, b2)

    if batch_major_out:
        return jnp.transpose(out_t)    # PyTorch layout (B, num_actions)
    return out_t                       # lane-dense (num_actions, B)


def init_params(key, num_states, hidden_units, num_actions, dtype=jnp.float32):
    """PyTorch-style Linear init: U(-1/sqrt(fan_in), 1/sqrt(fan_in)).
    Weights stored in nn.Linear layout (out_features, in_features)."""
    k1, k2, k3, k4 = jax.random.split(key, 4)
    bound1 = 1.0 / jnp.sqrt(num_states)
    bound2 = 1.0 / jnp.sqrt(hidden_units)
    w1 = jax.random.uniform(k1, (hidden_units, num_states), dtype, -bound1, bound1)
    b1 = jax.random.uniform(k2, (hidden_units,), dtype, -bound1, bound1)
    w2 = jax.random.uniform(k3, (num_actions, hidden_units), dtype, -bound2, bound2)
    b2 = jax.random.uniform(k4, (num_actions,), dtype, -bound2, bound2)
    return w1, b1, w2, b2


if __name__ == "__main__":
    # Lunar-Lander network_arch: num_states=8, num_hidden_units=64, num_actions=4.
    # Batch intentionally not a tile multiple (exercises the ragged last block)
    # and spans >1 grid step in the small-tile test (weight residency).
    B, num_states, hidden_units, num_actions = 500, 8, 64, 4

    key = jax.random.PRNGKey(0)
    kx, kp = jax.random.split(key)
    x = jax.random.normal(kx, (B, num_states), dtype=jnp.float32)
    w1, b1, w2, b2 = init_params(kp, num_states, hidden_units, num_actions)

    # Pure-JAX reference (PyTorch semantics: y = relu(x @ W1^T + b1) @ W2^T + b2)
    ref = jnp.maximum(x @ w1.T + b1, 0.0) @ w2.T + b2

    # bf16 MXU path (default); params prepared once, outside the per-call jit.
    params_bf16 = prepare_params(w1, b1, w2, b2, compute_dtype=jnp.bfloat16)
    out_bf16 = jax.block_until_ready(rl_model_forward(x, params_bf16))
    assert out_bf16.shape == (B, num_actions)
    assert jnp.allclose(out_bf16, ref, atol=2e-2, rtol=2e-2)

    # f32 path with a small explicit tile (multi-step grid + ragged last block);
    # tight check against the reference.
    params_f32 = prepare_params(w1, b1, w2, b2, compute_dtype=jnp.float32)
    out_f32 = jax.block_until_ready(rl_model_forward(x, params_f32, tile_b=256))
    assert out_f32.shape == (B, num_actions)
    assert jnp.allclose(out_f32, ref, atol=1e-4, rtol=1e-4)

    # Transposed-output path: skip the trailing layout pass for consumers that
    # can take (num_actions, B).
    out_t = jax.block_until_ready(
        rl_model_forward(x, params_f32, batch_major_out=False))
    assert out_t.shape == (num_actions, B)
    assert jnp.allclose(out_t.T, ref, atol=1e-4, rtol=1e-4)

    print("KERNEL_OK")
</pallas_src>

<mosaic_0001>
module attributes {stable_mosaic.version = 11 : i64} {
  func.func @_mlp_kernel(%arg0: i32, %arg1: memref<512x8xf32, #tpu.memory_space<vmem>>, %arg2: memref<64x8xbf16, #tpu.memory_space<vmem>>, %arg3: memref<64x1xf32, #tpu.memory_space<vmem>>, %arg4: memref<4x64xbf16, #tpu.memory_space<vmem>>, %arg5: memref<4x1xf32, #tpu.memory_space<vmem>>, %arg6: memref<4x512xf32, #tpu.memory_space<vmem>>) attributes {dimension_semantics = [#tpu.dimension_semantics<parallel>], iteration_bounds = array<i64: 1>, scalar_prefetch = 0 : i64, scratch_operands = 0 : i64, tpu.core_type = #tpu.core_type<tc>, window_params = [{transform_indices = @transform_0, window_bounds = array<i64: 512, 8>}, {pipeline_mode = #tpu.pipeline_mode<synchronous>, transform_indices = @transform_1, window_bounds = array<i64: 64, 8>}, {pipeline_mode = #tpu.pipeline_mode<synchronous>, transform_indices = @transform_2, window_bounds = array<i64: 64, 1>}, {pipeline_mode = #tpu.pipeline_mode<synchronous>, transform_indices = @transform_3, window_bounds = array<i64: 4, 64>}, {pipeline_mode = #tpu.pipeline_mode<synchronous>, transform_indices = @transform_4, window_bounds = array<i64: 4, 1>}, {transform_indices = @transform_5, window_bounds = array<i64: 4, 512>}]} {
    %c0 = arith.constant 0 : index
    %c0_0 = arith.constant 0 : index
    %0 = vector.load %arg1[%c0, %c0_0] : memref<512x8xf32, #tpu.memory_space<vmem>>, vector<512x8xf32>
    %1 = arith.truncf %0 : vector<512x8xf32> to vector<512x8xbf16>
    %c0_1 = arith.constant 0 : index
    %c0_2 = arith.constant 0 : index
    %2 = vector.load %arg2[%c0_1, %c0_2] : memref<64x8xbf16, #tpu.memory_space<vmem>>, vector<64x8xbf16>
    %cst = arith.constant dense<0.000000e+00> : vector<64x512xf32>
    %3 = tpu.matmul %2, %1, %cst {dimension_numbers = #tpu.dot_dimension_numbers<[1], [1], [0], [0], [0, 0, 1, 0], [], []>} : vector<64x8xbf16>, vector<512x8xbf16>, vector<64x512xf32> -> vector<64x512xf32>
    %c0_3 = arith.constant 0 : index
    %c0_4 = arith.constant 0 : index
    %4 = vector.load %arg3[%c0_3, %c0_4] : memref<64x1xf32, #tpu.memory_space<vmem>>, vector<64x1xf32>
    %5 = vector.broadcast %4 : vector<64x1xf32> to vector<64x512xf32>
    %6 = arith.addf %3, %5 : vector<64x512xf32>
    %cst_5 = arith.constant 0.000000e+00 : f32
    %7 = vector.broadcast %cst_5 : f32 to vector<64x512xf32>
    %8 = arith.maximumf %6, %7 : vector<64x512xf32>
    %c0_6 = arith.constant 0 : index
    %c0_7 = arith.constant 0 : index
    %9 = vector.load %arg4[%c0_6, %c0_7] : memref<4x64xbf16, #tpu.memory_space<vmem>>, vector<4x64xbf16>
    %10 = arith.truncf %8 : vector<64x512xf32> to vector<64x512xbf16>
    %cst_8 = arith.constant dense<0.000000e+00> : vector<4x512xf32>
    %11 = tpu.matmul %9, %10, %cst_8 {dimension_numbers = #tpu.dot_dimension_numbers<[1], [0], [0], [1], [0, 0, 1, 1], [], []>} : vector<4x64xbf16>, vector<64x512xbf16>, vector<4x512xf32> -> vector<4x512xf32>
    %c0_9 = arith.constant 0 : index
    %c0_10 = arith.constant 0 : index
    %12 = vector.load %arg5[%c0_9, %c0_10] : memref<4x1xf32, #tpu.memory_space<vmem>>, vector<4x1xf32>
    %13 = vector.broadcast %12 : vector<4x1xf32> to vector<4x512xf32>
    %14 = arith.addf %11, %13 : vector<4x512xf32>
    %c0_11 = arith.constant 0 : index
    %c0_12 = arith.constant 0 : index
    %15 = vector.load %arg6[%c0_11, %c0_12] : memref<4x512xf32, #tpu.memory_space<vmem>>, vector<4x512xf32>
    tpu.vector_store %arg6[%c0_11, %c0_12], %14 {strides = array<i32>} : memref<4x512xf32, #tpu.memory_space<vmem>>, vector<4x512xf32>,
    return
  }
  func.func @transform_0(%arg0: i32) -> (i32, i32) {
    %c0_i32 = arith.constant 0 : i32
    %c0_i32_0 = arith.constant 0 : i32
    return %arg0, %c0_i32 : i32, i32
  }
  func.func @transform_1(%arg0: i32) -> (i32, i32) {
    %c0_i32 = arith.constant 0 : i32
    %c0_i32_0 = arith.constant 0 : i32
    %c0_i32_1 = arith.constant 0 : i32
    return %c0_i32, %c0_i32_0 : i32, i32
  }
  func.func @transform_2(%arg0: i32) -> (i32, i32) {
    %c0_i32 = arith.constant 0 : i32
    %c0_i32_0 = arith.constant 0 : i32
    %c0_i32_1 = arith.constant 0 : i32
    return %c0_i32, %c0_i32_0 : i32, i32
  }
  func.func @transform_3(%arg0: i32) -> (i32, i32) {
    %c0_i32 = arith.constant 0 : i32
    %c0_i32_0 = arith.constant 0 : i32
    %c0_i32_1 = arith.constant 0 : i32
    return %c0_i32, %c0_i32_0 : i32, i32
  }
  func.func @transform_4(%arg0: i32) -> (i32, i32) {
    %c0_i32 = arith.constant 0 : i32
    %c0_i32_0 = arith.constant 0 : i32
    %c0_i32_1 = arith.constant 0 : i32
    return %c0_i32, %c0_i32_0 : i32, i32
  }
  func.func @transform_5(%arg0: i32) -> (i32, i32) {
    %c0_i32 = arith.constant 0 : i32
    %c0_i32_0 = arith.constant 0 : i32
    return %c0_i32, %arg0 : i32, i32
  }
}

</mosaic_0001>

<llo_original>
// kernel: rl_model_forward.1
$region0: #{rl_model_forward.1}
  #allocation0 [shape = 'u32[]', space=smem, size = 0x4, offset = 0x4, fixed_abs, tag = 'smem constant byte address 0x4 - core index']
  #allocation1 [shape = 'u32[72,128]{1,0:T(1,128)}', space=vmem, size = 0x9000, scoped, tag = 'internal scratch']
  %s0 = inlined_call_operand.vmem [shape: f32[500,8], index: 0, kind: input, shape index: {}]
  %s1 = inlined_call_operand.vmem [shape: bf16[64,8], index: 1, kind: input, shape index: {}]
  %s2 = inlined_call_operand.vmem [shape: f32[64,1], index: 2, kind: input, shape index: {}]
  %s3 = inlined_call_operand.vmem [shape: bf16[4,64], index: 3, kind: input, shape index: {}]
  %s4 = inlined_call_operand.vmem [shape: f32[4,1], index: 4, kind: input, shape index: {}]
  %s5 = inlined_call_operand.hbm [shape: f32[4,500], index: 5, kind: output, shape index: {}]
  %s6 = sld [smem:[#allocation0]]
  $region30: #{rl_model_forward.1} parent=0
    _
  %s8 = ssub.s32 1, %s6
  %s9 = scalar_select 0, %s8, %s6
  $region1: #{rl_model_forward.1} parent=0
    #allocation2 [shape = 'u8[8192]{0}', space=vmem, size = 0x2000, scoped, tag = 'output window, operand 0, single buffered']
    #allocation3 [shape = 's32[1]{0}', space=sflag, size = 0x4, scoped, tag = 'scoped memory for rl_model_forward.1']
    %10 = vsyncpa [#allocation3], 0
    // Predicated region
    $region2: #{rl_model_forward.1} parent=1 // pred_check
      _
    $region3: #{rl_model_forward.1} parent=1 // pred_check_branch
      %12 = sbr.rel (0) target = $region5
    $region4: #{rl_model_forward.1} parent=1 // pred_region
      _
    $region5: #{rl_model_forward.1} parent=1 // pred_fallthru
      _
    // Predicated region
    $region6: #{rl_model_forward.1} parent=1 // pred_check
      _
    $region7: #{rl_model_forward.1} parent=1 // pred_check_branch
      %14 = sbr.rel (0) target = $region9
    $region8: #{rl_model_forward.1} parent=1 // pred_region
      _
    $region9: #{rl_model_forward.1} parent=1 // pred_fallthru
      _
    // Predicated region
    $region10: #{rl_model_forward.1} parent=1 // pred_check
      _
    $region11: #{rl_model_forward.1} parent=1 // pred_check_branch
      %16 = sbr.rel (0) target = $region13
    $region12: #{rl_model_forward.1} parent=1 // pred_region
      _
    $region13: #{rl_model_forward.1} parent=1 // pred_fallthru
      _
    // Predicated region
    $region14: #{rl_model_forward.1} parent=1 // pred_check
      _
    $region15: #{rl_model_forward.1} parent=1 // pred_check_branch
      %18 = sbr.rel (0) target = $region17
    $region16: #{rl_model_forward.1} parent=1 // pred_region
      _
    $region17: #{rl_model_forward.1} parent=1 // pred_fallthru
      _
    // Predicated region
    $region18: #{rl_model_forward.1} parent=1 // pred_check
      _
    $region19: #{rl_model_forward.1} parent=1 // pred_check_branch
      %20 = sbr.rel (0) target = $region21
    $region20: #{rl_model_forward.1} parent=1 // pred_region
      _
    $region21: #{rl_model_forward.1} parent=1 // pred_fallthru
      _
    %v22 = vld [vmem:[%s0] sm:$0xff]
    %v23 = vld [vmem:[%s0 + $0x8] sm:$0xff]
    %v24 = vld [vmem:[%s0 + $0x10] sm:$0xff]
    %v25 = vld [vmem:[%s0 + $0x18] sm:$0xff]
    %v26 = vld [vmem:[%s0 + $0x20] sm:$0xff]
    %v27 = vld [vmem:[%s0 + $0x28] sm:$0xff]
    %v28 = vld [vmem:[%s0 + $0x30] sm:$0xff]
    %v29 = vld [vmem:[%s0 + $0x38] sm:$0xff]
    %v30 = vld [vmem:[%s0 + $0x40] sm:$0xff]
    %v31 = vld [vmem:[%s0 + $0x48] sm:$0xff]
    %v32 = vld [vmem:[%s0 + $0x50] sm:$0xff]
    %v33 = vld [vmem:[%s0 + $0x58] sm:$0xff]
    %v34 = vld [vmem:[%s0 + $0x60] sm:$0xff]
    %v35 = vld [vmem:[%s0 + $0x68] sm:$0xff]
    %v36 = vld [vmem:[%s0 + $0x70] sm:$0xff]
    %v37 = vld [vmem:[%s0 + $0x78] sm:$0xff]
    %v38 = vld [vmem:[%s0 + $0x80] sm:$0xff]
    %v39 = vld [vmem:[%s0 + $0x88] sm:$0xff]
    %v40 = vld [vmem:[%s0 + $0x90] sm:$0xff]
    %v41 = vld [vmem:[%s0 + $0x98] sm:$0xff]
    %v42 = vld [vmem:[%s0 + $0xa0] sm:$0xff]
    %v43 = vld [vmem:[%s0 + $0xa8] sm:$0xff]
    %v44 = vld [vmem:[%s0 + $0xb0] sm:$0xff]
    %v45 = vld [vmem:[%s0 + $0xb8] sm:$0xff]
    %v46 = vld [vmem:[%s0 + $0xc0] sm:$0xff]
    %v47 = vld [vmem:[%s0 + $0xc8] sm:$0xff]
    %v48 = vld [vmem:[%s0 + $0xd0] sm:$0xff]
    %v49 = vld [vmem:[%s0 + $0xd8] sm:$0xff]
    %v50 = vld [vmem:[%s0 + $0xe0] sm:$0xff]
    %v51 = vld [vmem:[%s0 + $0xe8] sm:$0xff]
    %v52 = vld [vmem:[%s0 + $0xf0] sm:$0xff]
    %v53 = vld [vmem:[%s0 + $0xf8] sm:$0xff]
    %v54 = vld [vmem:[%s0 + $0x100] sm:$0xff]
    %v55 = vld [vmem:[%s0 + $0x108] sm:$0xff]
    %v56 = vld [vmem:[%s0 + $0x110] sm:$0xff]
    %v57 = vld [vmem:[%s0 + $0x118] sm:$0xff]
    %v58 = vld [vmem:[%s0 + $0x120] sm:$0xff]
    %v59 = vld [vmem:[%s0 + $0x128] sm:$0xff]
    %v60 = vld [vmem:[%s0 + $0x130] sm:$0xff]
    %v61 = vld [vmem:[%s0 + $0x138] sm:$0xff]
    %v62 = vld [vmem:[%s0 + $0x140] sm:$0xff]
    %v63 = vld [vmem:[%s0 + $0x148] sm:$0xff]
    %v64 = vld [vmem:[%s0 + $0x150] sm:$0xff]
    %v65 = vld [vmem:[%s0 + $0x158] sm:$0xff]
    %v66 = vld [vmem:[%s0 + $0x160] sm:$0xff]
    %v67 = vld [vmem:[%s0 + $0x168] sm:$0xff]
    %v68 = vld [vmem:[%s0 + $0x170] sm:$0xff]
    %v69 = vld [vmem:[%s0 + $0x178] sm:$0xff]
    %v70 = vld [vmem:[%s0 + $0x180] sm:$0xff]
    %v71 = vld [vmem:[%s0 + $0x188] sm:$0xff]
    %v72 = vld [vmem:[%s0 + $0x190] sm:$0xff]
    %v73 = vld [vmem:[%s0 + $0x198] sm:$0xff]
    %v74 = vld [vmem:[%s0 + $0x1a0] sm:$0xff]
    %v75 = vld [vmem:[%s0 + $0x1a8] sm:$0xff]
    %v76 = vld [vmem:[%s0 + $0x1b0] sm:$0xff]
    %v77 = vld [vmem:[%s0 + $0x1b8] sm:$0xff]
    %v78 = vld [vmem:[%s0 + $0x1c0] sm:$0xff]
    %v79 = vld [vmem:[%s0 + $0x1c8] sm:$0xff]
    %v80 = vld [vmem:[%s0 + $0x1d0] sm:$0xff]
    %v81 = vld [vmem:[%s0 + $0x1d8] sm:$0xff]
    %v82 = vld [vmem:[%s0 + $0x1e0] sm:$0xff]
    %v83 = vld [vmem:[%s0 + $0x1e8] sm:$0xff]
    %v84 = vld [vmem:[%s0 + $0x1f0] sm:$0xff]
    %v85 = vld [vmem:[%s0 + $0x1f8] sm:$0xff]
    %v86 = vpack.c.bf16 %v23, %v22
    %v87 = vpack.c.bf16 %v25, %v24
    %v88 = vpack.c.bf16 %v27, %v26
    %v89 = vpack.c.bf16 %v29, %v28
    %v90 = vpack.c.bf16 %v31, %v30
    %v91 = vpack.c.bf16 %v33, %v32
    %v92 = vpack.c.bf16 %v35, %v34
    %v93 = vpack.c.bf16 %v37, %v36
    %v94 = vpack.c.bf16 %v39, %v38
    %v95 = vpack.c.bf16 %v41, %v40
    %v96 = vpack.c.bf16 %v43, %v42
    %v97 = vpack.c.bf16 %v45, %v44
    %v98 = vpack.c.bf16 %v47, %v46
    %v99 = vpack.c.bf16 %v49, %v48
    %v100 = vpack.c.bf16 %v51, %v50
    %v101 = vpack.c.bf16 %v53, %v52
    %v102 = vpack.c.bf16 %v55, %v54
    %v103 = vpack.c.bf16 %v57, %v56
    %v104 = vpack.c.bf16 %v59, %v58
    %v105 = vpack.c.bf16 %v61, %v60
    %v106 = vpack.c.bf16 %v63, %v62
    %v107 = vpack.c.bf16 %v65, %v64
    %v108 = vpack.c.bf16 %v67, %v66
    %v109 = vpack.c.bf16 %v69, %v68
    %v110 = vpack.c.bf16 %v71, %v70
    %v111 = vpack.c.bf16 %v73, %v72
    %v112 = vpack.c.bf16 %v75, %v74
    %v113 = vpack.c.bf16 %v77, %v76
    %v114 = vpack.c.bf16 %v79, %v78
    %v115 = vpack.c.bf16 %v81, %v80
    %v116 = vpack.c.bf16 %v83, %v82
    %v117 = vpack.c.bf16 %v85, %v84
    %v118 = vld [vmem:[%s1] sm:$0xf]
    %v119 = vld [vmem:[%s1 + $0x4] sm:$0xf]
    %v120 = vld [vmem:[%s1 + $0x8] sm:$0xf]
    %v121 = vld [vmem:[%s1 + $0xc] sm:$0xf]
    %v122 = vld [vmem:[%s1 + $0x10] sm:$0xf]
    %v123 = vld [vmem:[%s1 + $0x14] sm:$0xf]
    %v124 = vld [vmem:[%s1 + $0x18] sm:$0xf]
    %v125 = vld [vmem:[%s1 + $0x1c] sm:$0xf]
    %v126 = vld [vmem:[%s2] sm:$0xff]
    %v127 = vld [vmem:[%s2 + $0x8] sm:$0xff]
    %v128 = vld [vmem:[%s2 + $0x10] sm:$0xff]
    %v129 = vld [vmem:[%s2 + $0x18] sm:$0xff]
    %v130 = vld [vmem:[%s2 + $0x20] sm:$0xff]
    %v131 = vld [vmem:[%s2 + $0x28] sm:$0xff]
    %v132 = vld [vmem:[%s2 + $0x30] sm:$0xff]
    %v133 = vld [vmem:[%s2 + $0x38] sm:$0xff]
    %135 = vset.pattern.permute.xlu0 0
    %136 = vperm.xlu0 %135, %v126
    %v137 = vpop.permute.xlu0 %136
    %140 = vset.pattern.permute.xlu0 0
    %141 = vperm.xlu0 %140, %v127
    %v142 = vpop.permute.xlu0 %141
    %145 = vset.pattern.permute.xlu0 0
    %146 = vperm.xlu0 %145, %v128
    %v147 = vpop.permute.xlu0 %146
    %150 = vset.pattern.permute.xlu0 0
    %151 = vperm.xlu0 %150, %v129
    %v152 = vpop.permute.xlu0 %151
    %155 = vset.pattern.permute.xlu0 0
    %156 = vperm.xlu0 %155, %v130
    %v157 = vpop.permute.xlu0 %156
    %160 = vset.pattern.permute.xlu0 0
    %161 = vperm.xlu0 %160, %v131
    %v162 = vpop.permute.xlu0 %161
    %165 = vset.pattern.permute.xlu0 0
    %166 = vperm.xlu0 %165, %v132
    %v167 = vpop.permute.xlu0 %166
    %170 = vset.pattern.permute.xlu0 0
    %171 = vperm.xlu0 %170, %v133
    %v172 = vpop.permute.xlu0 %171
    %v182 = vunpack.c.l.b16 %v118
    %v183 = vunpack.c.l.b16 %v119
    %v184 = vunpack.c.l.b16 %v120
    %v185 = vunpack.c.l.b16 %v121
    %v186 = vunpack.c.l.b16 %v122
    %v187 = vunpack.c.l.b16 %v123
    %v188 = vunpack.c.l.b16 %v124
    %v189 = vunpack.c.l.b16 %v125
    %v190 = vpack.c.b16 %v183, %v182
    %v191 = vpack.c.b16 %v185, %v184
    %v192 = vpack.c.b16 %v187, %v186
    %v193 = vpack.c.b16 %v189, %v188
    %vm194 = vcmask 64512
    %v196 = vsel %vm194, %v190, 0
    %v199 = vsel %vm194, %v191, 0
    %v202 = vsel %vm194, %v192, 0
    %v205 = vsel %vm194, %v193, 0
    %v208 = vsel %vm194, %v86, 0
    %v211 = vsel %vm194, %v87, 0
    %v214 = vsel %vm194, %v88, 0
    %v217 = vsel %vm194, %v89, 0
    %v220 = vsel %vm194, %v90, 0
    %v223 = vsel %vm194, %v91, 0
    %v226 = vsel %vm194, %v92, 0
    %v229 = vsel %vm194, %v93, 0
    %v232 = vsel %vm194, %v94, 0
    %v235 = vsel %vm194, %v95, 0
    %v238 = vsel %vm194, %v96, 0
    %v241 = vsel %vm194, %v97, 0
    %v244 = vsel %vm194, %v98, 0
    %v247 = vsel %vm194, %v99, 0
    %v250 = vsel %vm194, %v100, 0
    %v253 = vsel %vm194, %v101, 0
    %v256 = vsel %vm194, %v102, 0
    %v259 = vsel %vm194, %v103, 0
    %v262 = vsel %vm194, %v104, 0
    %v265 = vsel %vm194, %v105, 0
    %v268 = vsel %vm194, %v106, 0
    %v271 = vsel %vm194, %v107, 0
    %v274 = vsel %vm194, %v108, 0
    %v277 = vsel %vm194, %v109, 0
    %v280 = vsel %vm194, %v110, 0
    %v283 = vsel %vm194, %v111, 0
    %v286 = vsel %vm194, %v112, 0
    %v289 = vsel %vm194, %v113, 0
    %v292 = vsel %vm194, %v114, 0
    %v295 = vsel %vm194, %v115, 0
    %v298 = vsel %vm194, %v116, 0
    %v301 = vsel %vm194, %v117, 0
    %303 = vmatpush.bf16.xpose.msra.mxu0 %v229
    %304 = vmatpush.bf16.xpose.msra.mxu0 %v226
    %305 = vmatpush.bf16.xpose.msra.mxu0 %v223
    %306 = vmatpush.bf16.xpose.msra.mxu0 %v220
    %307 = vmatpush.bf16.xpose.msra.mxu0 %v217
    %308 = vmatpush.bf16.xpose.msra.mxu0 %v214
    %309 = vmatpush.bf16.xpose.msra.mxu0 %v211
    %310 = vmatpush.bf16.xpose.msra.mxu0 %v208
    %311 = vmatmul.bf16.gmra.mxu0 %v196
    %v312 = vpop.f32.mrf.mxu0
    %v313 = vadd.f32 %v137, %v312
    %v314 = vpop.f32.mrf.mxu0
    %v315 = vadd.f32 %v142, %v314
    %316 = vmatmul.bf16.gmra.mxu0 %v199
    %v317 = vpop.f32.mrf.mxu0
    %v318 = vadd.f32 %v147, %v317
    %v319 = vpop.f32.mrf.mxu0
    %v320 = vadd.f32 %v152, %v319
    %321 = vmatmul.bf16.gmra.mxu0 %v202
    %v322 = vpop.f32.mrf.mxu0
    %v323 = vadd.f32 %v157, %v322
    %v324 = vpop.f32.mrf.mxu0
    %v325 = vadd.f32 %v162, %v324
    %326 = vmatmul.bf16.gmra.mxu0 %v205
    %v327 = vpop.f32.mrf.mxu0
    %v328 = vadd.f32 %v167, %v327
    %v329 = vpop.f32.mrf.mxu0
    %v330 = vadd.f32 %v172, %v329
    %331 = vdwg.mxu0
    %332 = vmatpush.bf16.xpose.msra.mxu0 %v253
    %333 = vmatpush.bf16.xpose.msra.mxu0 %v250
    %334 = vmatpush.bf16.xpose.msra.mxu0 %v247
    %335 = vmatpush.bf16.xpose.msra.mxu0 %v244
    %336 = vmatpush.bf16.xpose.msra.mxu0 %v241
    %337 = vmatpush.bf16.xpose.msra.mxu0 %v238
    %338 = vmatpush.bf16.xpose.msra.mxu0 %v235
    %339 = vmatpush.bf16.xpose.msra.mxu0 %v232
    %340 = vmatmul.bf16.gmra.mxu0 %v196
    %v341 = vpop.f32.mrf.mxu0
    %v342 = vadd.f32 %v137, %v341
    %v343 = vpop.f32.mrf.mxu0
    %v344 = vadd.f32 %v142, %v343
    %345 = vmatmul.bf16.gmra.mxu0 %v199
    %v346 = vpop.f32.mrf.mxu0
    %v347 = vadd.f32 %v147, %v346
    %v348 = vpop.f32.mrf.mxu0
    %v349 = vadd.f32 %v152, %v348
    %350 = vmatmul.bf16.gmra.mxu0 %v202
    %v351 = vpop.f32.mrf.mxu0
    %v352 = vadd.f32 %v157, %v351
    %v353 = vpop.f32.mrf.mxu0
    %v354 = vadd.f32 %v162, %v353
    %355 = vmatmul.bf16.gmra.mxu0 %v205
    %v356 = vpop.f32.mrf.mxu0
    %v357 = vadd.f32 %v167, %v356
    %v358 = vpop.f32.mrf.mxu0
    %v359 = vadd.f32 %v172, %v358
    %360 = vdwg.mxu0
    %361 = vmatpush.bf16.xpose.msra.mxu0 %v277
    %362 = vmatpush.bf16.xpose.msra.mxu0 %v274
    %363 = vmatpush.bf16.xpose.msra.mxu0 %v271
    %364 = vmatpush.bf16.xpose.msra.mxu0 %v268
    %365 = vmatpush.bf16.xpose.msra.mxu0 %v265
    %366 = vmatpush.bf16.xpose.msra.mxu0 %v262
    %367 = vmatpush.bf16.xpose.msra.mxu0 %v259
    %368 = vmatpush.bf16.xpose.msra.mxu0 %v256
    %369 = vmatmul.bf16.gmra.mxu0 %v196
    %v370 = vpop.f32.mrf.mxu0
    %v371 = vadd.f32 %v137, %v370
    %v372 = vpop.f32.mrf.mxu0
    %v373 = vadd.f32 %v142, %v372
    %374 = vmatmul.bf16.gmra.mxu0 %v199
    %v375 = vpop.f32.mrf.mxu0
    %v376 = vadd.f32 %v147, %v375
    %v377 = vpop.f32.mrf.mxu0
    %v378 = vadd.f32 %v152, %v377
    %379 = vmatmul.bf16.gmra.mxu0 %v202
    %v380 = vpop.f32.mrf.mxu0
    %v381 = vadd.f32 %v157, %v380
    %v382 = vpop.f32.mrf.mxu0
    %v383 = vadd.f32 %v162, %v382
    %384 = vmatmul.bf16.gmra.mxu0 %v205
    %v385 = vpop.f32.mrf.mxu0
    %v386 = vadd.f32 %v167, %v385
    %v387 = vpop.f32.mrf.mxu0
    %v388 = vadd.f32 %v172, %v387
    %389 = vdwg.mxu0
    %390 = vmatpush.bf16.xpose.msra.mxu0 %v301
    %391 = vmatpush.bf16.xpose.msra.mxu0 %v298
    %392 = vmatpush.bf16.xpose.msra.mxu0 %v295
    %393 = vmatpush.bf16.xpose.msra.mxu0 %v292
    %394 = vmatpush.bf16.xpose.msra.mxu0 %v289
    %395 = vmatpush.bf16.xpose.msra.mxu0 %v286
    %396 = vmatpush.bf16.xpose.msra.mxu0 %v283
    %397 = vmatpush.bf16.xpose.msra.mxu0 %v280
    %398 = vmatmul.bf16.gmra.mxu0 %v196
    %v399 = vpop.f32.mrf.mxu0
    %v400 = vadd.f32 %v137, %v399
    %v401 = vpop.f32.mrf.mxu0
    %v402 = vadd.f32 %v142, %v401
    %403 = vmatmul.bf16.gmra.mxu0 %v199
    %v404 = vpop.f32.mrf.mxu0
    %v405 = vadd.f32 %v147, %v404
    %v406 = vpop.f32.mrf.mxu0
    %v407 = vadd.f32 %v152, %v406
    %408 = vmatmul.bf16.gmra.mxu0 %v202
    %v409 = vpop.f32.mrf.mxu0
    %v410 = vadd.f32 %v157, %v409
    %v411 = vpop.f32.mrf.mxu0
    %v412 = vadd.f32 %v162, %v411
    %413 = vmatmul.bf16.gmra.mxu0 %v205
    %v414 = vpop.f32.mrf.mxu0
    %v415 = vadd.f32 %v167, %v414
    %v416 = vpop.f32.mrf.mxu0
    %v417 = vadd.f32 %v172, %v416
    %418 = vdwg.mxu0
    %v419 = vmax.f32 %v313, 0.0
    %v420 = vmax.f32 %v342, 0.0
    %v421 = vmax.f32 %v371, 0.0
    %v422 = vmax.f32 %v400, 0.0
    %v423 = vmax.f32 %v315, 0.0
    %v424 = vmax.f32 %v344, 0.0
    %v425 = vmax.f32 %v373, 0.0
    %v426 = vmax.f32 %v402, 0.0
    %v427 = vmax.f32 %v318, 0.0
    %v428 = vmax.f32 %v347, 0.0
    %v429 = vmax.f32 %v376, 0.0
    %v430 = vmax.f32 %v405, 0.0
    %v431 = vmax.f32 %v320, 0.0
    %v432 = vmax.f32 %v349, 0.0
    %v433 = vmax.f32 %v378, 0.0
    %v434 = vmax.f32 %v407, 0.0
    %v435 = vmax.f32 %v323, 0.0
    %v436 = vmax.f32 %v352, 0.0
    %v437 = vmax.f32 %v381, 0.0
    %v438 = vmax.f32 %v410, 0.0
    %v439 = vmax.f32 %v325, 0.0
    %v440 = vmax.f32 %v354, 0.0
    %v441 = vmax.f32 %v383, 0.0
    %v442 = vmax.f32 %v412, 0.0
    %v443 = vmax.f32 %v328, 0.0
    %v444 = vmax.f32 %v357, 0.0
    %v445 = vmax.f32 %v386, 0.0
    %v446 = vmax.f32 %v415, 0.0
    %v447 = vmax.f32 %v330, 0.0
    %v448 = vmax.f32 %v359, 0.0
    %v449 = vmax.f32 %v388, 0.0
    %v450 = vmax.f32 %v417, 0.0
    %v451 = vld [vmem:[%s3] sm:$0x3]
    %v452 = vpack.c.bf16 %v423, %v419
    %v453 = vpack.c.bf16 %v424, %v420
    %v454 = vpack.c.bf16 %v425, %v421
    %v455 = vpack.c.bf16 %v426, %v422
    %v456 = vpack.c.bf16 %v431, %v427
    %v457 = vpack.c.bf16 %v432, %v428
    %v458 = vpack.c.bf16 %v433, %v429
    %v459 = vpack.c.bf16 %v434, %v430
    %v460 = vpack.c.bf16 %v439, %v435
    %v461 = vpack.c.bf16 %v440, %v436
    %v462 = vpack.c.bf16 %v441, %v437
    %v463 = vpack.c.bf16 %v442, %v438
    %v464 = vpack.c.bf16 %v447, %v443
    %v465 = vpack.c.bf16 %v448, %v444
    %v466 = vpack.c.bf16 %v449, %v445
    %v467 = vpack.c.bf16 %v450, %v446
    %v468 = vld [vmem:[%s4] sm:$0xf]
    %470 = vset.pattern.permute.xlu0 0
    %471 = vperm.xlu0 %470, %v468
    %v472 = vpop.permute.xlu0 %471
    %vm474 = vcmask 523264
    %v476 = vsel %vm474, %v451, 0
    %478 = vmatpush.bf16.msra.mxu0 0
    %479 = vmatpush.bf16.msra.mxu0 0
    %480 = vmatpush.bf16.msra.mxu0 0
    %481 = vmatpush.bf16.msra.mxu0 0
    %482 = vmatpush.bf16.msra.mxu0 %v464
    %483 = vmatpush.bf16.msra.mxu0 %v460
    %484 = vmatpush.bf16.msra.mxu0 %v456
    %485 = vmatpush.bf16.msra.mxu0 %v452
    %486 = vmatmul.bf16.gmra.mxu0 %v476
    %v487 = vpop.f32.mrf.mxu0
    %v488 = vadd.f32 %v472, %v487
    %v489 = vpop.f32.mrf.mxu0
    %490 = vdwg.mxu0
    %491 = vmatpush.bf16.msra.mxu0 0
    %492 = vmatpush.bf16.msra.mxu0 0
    %493 = vmatpush.bf16.msra.mxu0 0
    %494 = vmatpush.bf16.msra.mxu0 0
    %495 = vmatpush.bf16.msra.mxu0 %v465
    %496 = vmatpush.bf16.msra.mxu0 %v461
    %497 = vmatpush.bf16.msra.mxu0 %v457
    %498 = vmatpush.bf16.msra.mxu0 %v453
    %499 = vmatmul.bf16.gmra.mxu0 %v476
    %v500 = vpop.f32.mrf.mxu0
    %v501 = vadd.f32 %v472, %v500
    %v502 = vpop.f32.mrf.mxu0
    %503 = vdwg.mxu0
    %504 = vmatpush.bf16.msra.mxu0 0
    %505 = vmatpush.bf16.msra.mxu0 0
    %506 = vmatpush.bf16.msra.mxu0 0
    %507 = vmatpush.bf16.msra.mxu0 0
    %508 = vmatpush.bf16.msra.mxu0 %v466
    %509 = vmatpush.bf16.msra.mxu0 %v462
    %510 = vmatpush.bf16.msra.mxu0 %v458
    %511 = vmatpush.bf16.msra.mxu0 %v454
    %512 = vmatmul.bf16.gmra.mxu0 %v476
    %v513 = vpop.f32.mrf.mxu0
    %v514 = vadd.f32 %v472, %v513
    %v515 = vpop.f32.mrf.mxu0
    %516 = vdwg.mxu0
    %517 = vmatpush.bf16.msra.mxu0 0
    %518 = vmatpush.bf16.msra.mxu0 0
    %519 = vmatpush.bf16.msra.mxu0 0
    %520 = vmatpush.bf16.msra.mxu0 0
    %521 = vmatpush.bf16.msra.mxu0 %v467
    %522 = vmatpush.bf16.msra.mxu0 %v463
    %523 = vmatpush.bf16.msra.mxu0 %v459
    %524 = vmatpush.bf16.msra.mxu0 %v455
    %525 = vmatmul.bf16.gmra.mxu0 %v476
    %v526 = vpop.f32.mrf.mxu0
    %v527 = vadd.f32 %v472, %v526
    %v528 = vpop.f32.mrf.mxu0
    %529 = vdwg.mxu0
    %v534 = vrot.slane %v501, 4
    %v535 = vrot.slane %v527, 4
    %vm536 = vcmask 1043456
    %v537 = vsel %vm536, %v488, %v534
    %v538 = vsel %vm536, %v514, %v535
    %541 = vst [vmem:[#allocation2] sm:$0xff] %v537
    %542 = vst [vmem:[#allocation2 + $0x8] sm:$0xff] %v538
    // Predicated region
    $region22: #{rl_model_forward.1} parent=1 // pred_check
      _
    $region23: #{rl_model_forward.1} parent=1 // pred_check_branch
      %544 = sbr.rel (0) target = $region25
    $region24: #{rl_model_forward.1} parent=1 // pred_region
      %546 = vsyncadd [#allocation3], 0
      %s548 = sshll.u32 [#allocation2], 4
      %s549 = int_to_ptr.vmem [resolvable:$true] %s548
      %s550 = sshll.u32 %s5, 4
      %s551 = int_to_ptr.hbm [resolvable:$true] %s550
      %553 = dma.vmem_to_hbm [thread:$0]  %s549, 256, %s551, [#allocation3]
    $region25: #{rl_model_forward.1} parent=1 // pred_fallthru
      _
    // Predicated region
    $region26: #{rl_model_forward.1} parent=1 // pred_check
      _
    $region27: #{rl_model_forward.1} parent=1 // pred_check_branch
      %555 = sbr.rel (0) target = $region29
    $region28: #{rl_model_forward.1} parent=1 // pred_region
      %557 = dma.done [#allocation3], 256
    $region29: #{rl_model_forward.1} parent=1 // pred_fallthru
      _
    %558 = vsyncpa [#allocation3], 1

</llo_original>
